<compile_context>
chip_gen: v5e
topology: v5e:2x2
jax: 0.10.0
libtpu: 0.0.40
codegen_flags: <defaults>
</compile_context>

<pallas_src>
import functools

import jax
import jax.numpy as jnp
from jax.experimental import pallas as pl
from jax.experimental.pallas import tpu as pltpu


def _btn_kernel(
    bits_ref,  # SMEM (D,) int32       x-bit per core (scalar prefetch)
    pc_ref,    # VMEM (2, CF+B)        row 0: [core means flat | left mean], row 1: logvars
    pr_ref,    # VMEM (2B, Op)         rows 0..B-1 right mean, rows B..2B-1 right logvar
    ec_ref,    # VMEM (Sh, CF+B)       per-sample noise: cores (both bit slices) + left
    er_ref,    # VMEM (Sh, B*Op)       per-sample right-boundary noise, lane = k*Op + o
    out_ref,   # VMEM (Sh, Op)         logits for this block of samples
    *, D, B,
):
    Sh = ec_ref.shape[0]
    CF = D * B * 2 * B
    Op = out_ref.shape[-1]

    # Hoisted, sample-invariant std (single EUP pass) + one lane-dense reparam FMA that
    # builds every sample's cores (both bit slices) and left boundary at once.
    std = jnp.exp(0.5 * pc_ref[1:2, :])                  # (1, CF+B)
    rep = pc_ref[0:1, :] + ec_ref[...] * std             # (Sh, CF+B)

    # Left boundary vector.
    vec = rep[:, CF:CF + B]                              # (Sh, B)

    # MPS contraction chain.  The x-conditioned 0/1 slice of each core is picked with a
    # branch-free scalar blend (bits live in SMEM).  The chain is small VPU FMAs on
    # (Sh, B) slabs; the lane extracts/broadcasts go to the XLU, which has slack here.
    for d in range(D):
        w = bits_ref[d].astype(jnp.float32)              # 0.0 or 1.0
        acc = jnp.zeros((Sh, B), jnp.float32)
        for k in range(B):
            base = (d * B + k) * 2 * B                   # bit-0 slice start (bit-1 adjacent)
            c0 = rep[:, base:base + B]
            c1 = rep[:, base + B:base + 2 * B]
            core_dk = c0 + w * (c1 - c0)
            acc = acc + vec[:, k:k + 1] * core_dk
        vec = acc

    # Right boundary: hoisted exp + reparam, then projection to lane-dense logits.
    r_mean = pr_ref[0:B, :]                              # (B, Op)
    r_std = jnp.exp(0.5 * pr_ref[B:2 * B, :])            # (B, Op), sample-invariant
    out = jnp.zeros((Sh, Op), jnp.float32)
    for k in range(B):
        right_k = r_mean[k:k + 1, :] + er_ref[:, k * Op:(k + 1) * Op] * r_std[k:k + 1, :]
        out = out + vec[:, k:k + 1] * right_k
    out_ref[...] = out


def default_sample_blocks():
    """2-way sample split only on chips with 2 TensorCores per chip (v7x); 1 otherwise."""
    try:
        kind = jax.devices()[0].device_kind.lower()
    except Exception:
        return 1
    return 2 if "v7" in kind else 1


@functools.partial(jax.jit, static_argnames=("n_blocks",))
def bayesian_tn_forward(
    x,              # (batch, D) f32
    core_means,     # (D, B, 2, B) f32 — stack of the PyTorch (bond, 2, bond) core params
    core_logvars,   # (D, B, 2, B) f32
    left_mean,      # (1, B) f32
    left_logvar,    # (1, B) f32
    right_mean,     # (B, O) f32
    right_logvar,   # (B, O) f32
    eps_cores,      # (S, D, B, 2, B) f32 — N(0,1) reparameterization noise per MC sample
    eps_left,       # (S, 1, B) f32
    eps_right,      # (S, B, O) f32
    n_blocks=1,
):
    D, B = core_means.shape[0], core_means.shape[1]
    O = right_mean.shape[1]
    S = eps_cores.shape[0]
    CF = D * B * 2 * B
    CFB = CF + B

    # Bit pattern from batch row 0 (matches the PyTorch forward) -> SMEM scalar prefetch.
    bits = (x[0] > 0.5).astype(jnp.int32)                                  # (D,)

    # Padded sizes: samples on sublanes (8-aligned per block), output lane-dense (128).
    sh = 8 * (-(-S // (8 * n_blocks)))
    s_pad = sh * n_blocks
    o_pad = 128 * (-(-O // 128))

    # ---- sample-invariant params: natural row-major flattening, no gathers ----
    pc = jnp.stack([
        jnp.concatenate([core_means.reshape(CF), left_mean.reshape(B)]),
        jnp.concatenate([core_logvars.reshape(CF), left_logvar.reshape(B)]),
    ])                                                                     # (2, CFB)
    pr = jnp.concatenate([
        jnp.pad(right_mean, ((0, 0), (0, o_pad - O))),
        jnp.pad(right_logvar, ((0, 0), (0, o_pad - O))),
    ])                                                                     # (2B, o_pad)
    # exp(0)=1 in padded right-logvar lanes is harmless: paired mean/eps pads are zero
    # and padded lanes are sliced off after the kernel.

    # ---- per-sample noise, lane-dense (no bit-gather, no transpose; reshape + pad) ----
    ec = jnp.concatenate([eps_cores.reshape(S, CF), eps_left.reshape(S, B)], axis=1)
    ec = jnp.pad(ec, ((0, s_pad - S), (0, 0)))                             # (s_pad, CFB)
    er = jnp.pad(eps_right, ((0, s_pad - S), (0, 0), (0, o_pad - O)))
    er = er.reshape(s_pad, B * o_pad)                                      # (s_pad, B*o_pad)

    grid_spec = pltpu.PrefetchScalarGridSpec(
        num_scalar_prefetch=1,
        grid=(n_blocks,),
        in_specs=[
            pl.BlockSpec((2, CFB), lambda g, _b: (0, 0)),                  # core+left params
            pl.BlockSpec((2 * B, o_pad), lambda g, _b: (0, 0)),            # right params
            pl.BlockSpec((sh, CFB), lambda g, _b: (g, 0)),                 # core+left noise
            pl.BlockSpec((sh, B * o_pad), lambda g, _b: (g, 0)),           # right noise
        ],
        out_specs=pl.BlockSpec((sh, o_pad), lambda g, _b: (g, 0)),
    )

    # Single-TC chips run one grid step; on v7x force a real per-core split of the axis.
    dim_sem = (pltpu.CORE_PARALLEL,) if n_blocks > 1 else ("arbitrary",)

    out = pl.pallas_call(
        functools.partial(_btn_kernel, D=D, B=B),
        out_shape=jax.ShapeDtypeStruct((s_pad, o_pad), jnp.float32),
        grid_spec=grid_spec,
        compiler_params=pltpu.CompilerParams(dimension_semantics=dim_sem),
    )(bits, pc, pr, ec, er)

    return out[:S, :O].reshape(S, 1, O)


def _reference_forward(x, core_means, core_logvars, left_mean, left_logvar,
                       right_mean, right_logvar, eps_cores, eps_left, eps_right):
    """Pure-JAX reference mirroring the PyTorch forward (same eps draws)."""
    n_samples = eps_cores.shape[0]
    D = core_means.shape[0]
    bits = (x[0] > 0.5).astype(jnp.int32)
    outs = []
    for s in range(n_samples):
        cores = core_means + eps_cores[s] * jnp.exp(0.5 * core_logvars)   # (D, B, 2, B)
        left = left_mean + eps_left[s] * jnp.exp(0.5 * left_logvar)
        right = right_mean + eps_right[s] * jnp.exp(0.5 * right_logvar)
        vec = left
        for i in range(D):
            vec = vec @ cores[i, :, bits[i], :]
        outs.append(vec @ right)
    return jnp.stack(outs)


if __name__ == "__main__":
    # Small deterministic config consistent with the module.
    batch, input_dim, output_dim = 2, 8, 3
    bond_dim, n_samples = 4, 10

    key = jax.random.PRNGKey(0)
    keys = jax.random.split(key, 7)

    # Parameters in the PyTorch layout: core i is (bond, 2, bond).
    core_means = jax.random.normal(keys[0], (input_dim, bond_dim, 2, bond_dim), jnp.float32)
    core_logvars = jnp.zeros((input_dim, bond_dim, 2, bond_dim), jnp.float32)
    left_mean = jax.random.normal(keys[1], (1, bond_dim), jnp.float32)
    left_logvar = jnp.zeros((1, bond_dim), jnp.float32)
    right_mean = jax.random.normal(keys[2], (bond_dim, output_dim), jnp.float32)
    right_logvar = jnp.zeros((bond_dim, output_dim), jnp.float32)

    # Reparameterization noise (N(0,1)), one draw per Monte-Carlo sample.
    # TODO(synk): torch.randn_like draws happen inside the PyTorch forward; here the
    # noise is supplied externally so kernel and reference share identical draws.
    eps_cores = jax.random.normal(
        keys[3], (n_samples, input_dim, bond_dim, 2, bond_dim), jnp.float32)
    eps_left = jax.random.normal(keys[4], (n_samples, 1, bond_dim), jnp.float32)
    eps_right = jax.random.normal(keys[5], (n_samples, bond_dim, output_dim), jnp.float32)

    # Input.
    x = jax.random.uniform(keys[6], (batch, input_dim), jnp.float32)

    logits = bayesian_tn_forward(
        x, core_means, core_logvars, left_mean, left_logvar,
        right_mean, right_logvar, eps_cores, eps_left, eps_right,
        n_blocks=default_sample_blocks(),
    )
    logits = jax.block_until_ready(logits)

    ref = _reference_forward(
        x, core_means, core_logvars, left_mean, left_logvar,
        right_mean, right_logvar, eps_cores, eps_left, eps_right,
    )
    assert logits.shape == (n_samples, 1, output_dim)
    assert jnp.allclose(logits, ref, atol=1e-4, rtol=1e-4), float(jnp.max(jnp.abs(logits - ref)))

    print("KERNEL_OK")
</pallas_src>

<mosaic_0001>
module attributes {stable_mosaic.version = 11 : i64} {
  func.func @_btn_kernel(%arg0: i32, %arg1: memref<8xi32, #tpu.memory_space<smem>>, %arg2: memref<2x260xf32, #tpu.memory_space<vmem>>, %arg3: memref<8x128xf32, #tpu.memory_space<vmem>>, %arg4: memref<16x260xf32, #tpu.memory_space<vmem>>, %arg5: memref<16x512xf32, #tpu.memory_space<vmem>>, %arg6: memref<16x128xf32, #tpu.memory_space<vmem>>) attributes {dimension_semantics = [#tpu.dimension_semantics<arbitrary>], iteration_bounds = array<i64: 1>, scalar_prefetch = 1 : i64, scratch_operands = 0 : i64, tpu.core_type = #tpu.core_type<tc>, window_params = [{pipeline_mode = #tpu.pipeline_mode<synchronous>, transform_indices = @transform_0, window_bounds = array<i64: 2, 260>}, {pipeline_mode = #tpu.pipeline_mode<synchronous>, transform_indices = @transform_1, window_bounds = array<i64: 8, 128>}, {transform_indices = @transform_2, window_bounds = array<i64: 16, 260>}, {transform_indices = @transform_3, window_bounds = array<i64: 16, 512>}, {transform_indices = @transform_4, window_bounds = array<i64: 16, 128>}]} {
    %c1 = arith.constant 1 : index
    %c0 = arith.constant 0 : index
    %0 = vector.load %arg2[%c1, %c0] : memref<2x260xf32, #tpu.memory_space<vmem>>, vector<1x260xf32>
    %cst = arith.constant 5.000000e-01 : f32
    %1 = vector.broadcast %cst : f32 to vector<1x260xf32>
    %2 = arith.mulf %1, %0 : vector<1x260xf32>
    %3 = math.exp %2 : vector<1x260xf32>
    %c0_0 = arith.constant 0 : index
    %c0_1 = arith.constant 0 : index
    %4 = vector.load %arg2[%c0_0, %c0_1] : memref<2x260xf32, #tpu.memory_space<vmem>>, vector<1x260xf32>
    %c0_2 = arith.constant 0 : index
    %c0_3 = arith.constant 0 : index
    %5 = vector.load %arg4[%c0_2, %c0_3] : memref<16x260xf32, #tpu.memory_space<vmem>>, vector<16x260xf32>
    %6 = vector.broadcast %3 : vector<1x260xf32> to vector<16x260xf32>
    %7 = arith.mulf %5, %6 : vector<16x260xf32>
    %8 = vector.broadcast %4 : vector<1x260xf32> to vector<16x260xf32>
    %9 = arith.addf %8, %7 : vector<16x260xf32>
    %10 = vector.extract_strided_slice %9 {offsets = [0, 256], sizes = [16, 4], strides = [1, 1]} : vector<16x260xf32> to vector<16x4xf32>
    %c0_4 = arith.constant 0 : index
    %11 = memref.load %arg1[%c0_4] : memref<8xi32, #tpu.memory_space<smem>>
    %12 = arith.sitofp %11 : i32 to f32
    %cst_5 = arith.constant 0.000000e+00 : f32
    %13 = vector.broadcast %cst_5 : f32 to vector<16x4xf32>
    %14 = vector.extract_strided_slice %9 {offsets = [0, 0], sizes = [16, 4], strides = [1, 1]} : vector<16x260xf32> to vector<16x4xf32>
    %15 = vector.extract_strided_slice %9 {offsets = [0, 4], sizes = [16, 4], strides = [1, 1]} : vector<16x260xf32> to vector<16x4xf32>
    %16 = arith.subf %15, %14 : vector<16x4xf32>
    %17 = vector.broadcast %12 : f32 to vector<16x4xf32>
    %18 = arith.mulf %17, %16 : vector<16x4xf32>
    %19 = arith.addf %14, %18 : vector<16x4xf32>
    %20 = vector.extract_strided_slice %10 {offsets = [0, 0], sizes = [16, 1], strides = [1, 1]} : vector<16x4xf32> to vector<16x1xf32>
    %21 = vector.broadcast %20 : vector<16x1xf32> to vector<16x4xf32>
    %22 = arith.mulf %21, %19 : vector<16x4xf32>
    %23 = arith.addf %13, %22 : vector<16x4xf32>
    %24 = vector.extract_strided_slice %9 {offsets = [0, 8], sizes = [16, 4], strides = [1, 1]} : vector<16x260xf32> to vector<16x4xf32>
    %25 = vector.extract_strided_slice %9 {offsets = [0, 12], sizes = [16, 4], strides = [1, 1]} : vector<16x260xf32> to vector<16x4xf32>
    %26 = arith.subf %25, %24 : vector<16x4xf32>
    %27 = vector.broadcast %12 : f32 to vector<16x4xf32>
    %28 = arith.mulf %27, %26 : vector<16x4xf32>
    %29 = arith.addf %24, %28 : vector<16x4xf32>
    %30 = vector.extract_strided_slice %10 {offsets = [0, 1], sizes = [16, 1], strides = [1, 1]} : vector<16x4xf32> to vector<16x1xf32>
    %31 = vector.broadcast %30 : vector<16x1xf32> to vector<16x4xf32>
    %32 = arith.mulf %31, %29 : vector<16x4xf32>
    %33 = arith.addf %23, %32 : vector<16x4xf32>
    %34 = vector.extract_strided_slice %9 {offsets = [0, 16], sizes = [16, 4], strides = [1, 1]} : vector<16x260xf32> to vector<16x4xf32>
    %35 = vector.extract_strided_slice %9 {offsets = [0, 20], sizes = [16, 4], strides = [1, 1]} : vector<16x260xf32> to vector<16x4xf32>
    %36 = arith.subf %35, %34 : vector<16x4xf32>
    %37 = vector.broadcast %12 : f32 to vector<16x4xf32>
    %38 = arith.mulf %37, %36 : vector<16x4xf32>
    %39 = arith.addf %34, %38 : vector<16x4xf32>
    %40 = vector.extract_strided_slice %10 {offsets = [0, 2], sizes = [16, 1], strides = [1, 1]} : vector<16x4xf32> to vector<16x1xf32>
    %41 = vector.broadcast %40 : vector<16x1xf32> to vector<16x4xf32>
    %42 = arith.mulf %41, %39 : vector<16x4xf32>
    %43 = arith.addf %33, %42 : vector<16x4xf32>
    %44 = vector.extract_strided_slice %9 {offsets = [0, 24], sizes = [16, 4], strides = [1, 1]} : vector<16x260xf32> to vector<16x4xf32>
    %45 = vector.extract_strided_slice %9 {offsets = [0, 28], sizes = [16, 4], strides = [1, 1]} : vector<16x260xf32> to vector<16x4xf32>
    %46 = arith.subf %45, %44 : vector<16x4xf32>
    %47 = vector.broadcast %12 : f32 to vector<16x4xf32>
    %48 = arith.mulf %47, %46 : vector<16x4xf32>
    %49 = arith.addf %44, %48 : vector<16x4xf32>
    %50 = vector.extract_strided_slice %10 {offsets = [0, 3], sizes = [16, 1], strides = [1, 1]} : vector<16x4xf32> to vector<16x1xf32>
    %51 = vector.broadcast %50 : vector<16x1xf32> to vector<16x4xf32>
    %52 = arith.mulf %51, %49 : vector<16x4xf32>
    %53 = arith.addf %43, %52 : vector<16x4xf32>
    %c1_6 = arith.constant 1 : index
    %54 = memref.load %arg1[%c1_6] : memref<8xi32, #tpu.memory_space<smem>>
    %55 = arith.sitofp %54 : i32 to f32
    %cst_7 = arith.constant 0.000000e+00 : f32
    %56 = vector.broadcast %cst_7 : f32 to vector<16x4xf32>
    %57 = vector.extract_strided_slice %9 {offsets = [0, 32], sizes = [16, 4], strides = [1, 1]} : vector<16x260xf32> to vector<16x4xf32>
    %58 = vector.extract_strided_slice %9 {offsets = [0, 36], sizes = [16, 4], strides = [1, 1]} : vector<16x260xf32> to vector<16x4xf32>
    %59 = arith.subf %58, %57 : vector<16x4xf32>
    %60 = vector.broadcast %55 : f32 to vector<16x4xf32>
    %61 = arith.mulf %60, %59 : vector<16x4xf32>
    %62 = arith.addf %57, %61 : vector<16x4xf32>
    %63 = vector.extract_strided_slice %53 {offsets = [0, 0], sizes = [16, 1], strides = [1, 1]} : vector<16x4xf32> to vector<16x1xf32>
    %64 = vector.broadcast %63 : vector<16x1xf32> to vector<16x4xf32>
    %65 = arith.mulf %64, %62 : vector<16x4xf32>
    %66 = arith.addf %56, %65 : vector<16x4xf32>
    %67 = vector.extract_strided_slice %9 {offsets = [0, 40], sizes = [16, 4], strides = [1, 1]} : vector<16x260xf32> to vector<16x4xf32>
    %68 = vector.extract_strided_slice %9 {offsets = [0, 44], sizes = [16, 4], strides = [1, 1]} : vector<16x260xf32> to vector<16x4xf32>
    %69 = arith.subf %68, %67 : vector<16x4xf32>
    %70 = vector.broadcast %55 : f32 to vector<16x4xf32>
    %71 = arith.mulf %70, %69 : vector<16x4xf32>
    %72 = arith.addf %67, %71 : vector<16x4xf32>
    %73 = vector.extract_strided_slice %53 {offsets = [0, 1], sizes = [16, 1], strides = [1, 1]} : vector<16x4xf32> to vector<16x1xf32>
    %74 = vector.broadcast %73 : vector<16x1xf32> to vector<16x4xf32>
    %75 = arith.mulf %74, %72 : vector<16x4xf32>
    %76 = arith.addf %66, %75 : vector<16x4xf32>
    %77 = vector.extract_strided_slice %9 {offsets = [0, 48], sizes = [16, 4], strides = [1, 1]} : vector<16x260xf32> to vector<16x4xf32>
    %78 = vector.extract_strided_slice %9 {offsets = [0, 52], sizes = [16, 4], strides = [1, 1]} : vector<16x260xf32> to vector<16x4xf32>
    %79 = arith.subf %78, %77 : vector<16x4xf32>
    %80 = vector.broadcast %55 : f32 to vector<16x4xf32>
    %81 = arith.mulf %80, %79 : vector<16x4xf32>
    %82 = arith.addf %77, %81 : vector<16x4xf32>
    %83 = vector.extract_strided_slice %53 {offsets = [0, 2], sizes = [16, 1], strides = [1, 1]} : vector<16x4xf32> to vector<16x1xf32>
    %84 = vector.broadcast %83 : vector<16x1xf32> to vector<16x4xf32>
    %85 = arith.mulf %84, %82 : vector<16x4xf32>
    %86 = arith.addf %76, %85 : vector<16x4xf32>
    %87 = vector.extract_strided_slice %9 {offsets = [0, 56], sizes = [16, 4], strides = [1, 1]} : vector<16x260xf32> to vector<16x4xf32>
    %88 = vector.extract_strided_slice %9 {offsets = [0, 60], sizes = [16, 4], strides = [1, 1]} : vector<16x260xf32> to vector<16x4xf32>
    %89 = arith.subf %88, %87 : vector<16x4xf32>
    %90 = vector.broadcast %55 : f32 to vector<16x4xf32>
    %91 = arith.mulf %90, %89 : vector<16x4xf32>
    %92 = arith.addf %87, %91 : vector<16x4xf32>
    %93 = vector.extract_strided_slice %53 {offsets = [0, 3], sizes = [16, 1], strides = [1, 1]} : vector<16x4xf32> to vector<16x1xf32>
    %94 = vector.broadcast %93 : vector<16x1xf32> to vector<16x4xf32>
    %95 = arith.mulf %94, %92 : vector<16x4xf32>
    %96 = arith.addf %86, %95 : vector<16x4xf32>
    %c2 = arith.constant 2 : index
    %97 = memref.load %arg1[%c2] : memref<8xi32, #tpu.memory_space<smem>>
    %98 = arith.sitofp %97 : i32 to f32
    %cst_8 = arith.constant 0.000000e+00 : f32
    %99 = vector.broadcast %cst_8 : f32 to vector<16x4xf32>
    %100 = vector.extract_strided_slice %9 {offsets = [0, 64], sizes = [16, 4], strides = [1, 1]} : vector<16x260xf32> to vector<16x4xf32>
    %101 = vector.extract_strided_slice %9 {offsets = [0, 68], sizes = [16, 4], strides = [1, 1]} : vector<16x260xf32> to vector<16x4xf32>
    %102 = arith.subf %101, %100 : vector<16x4xf32>
    %103 = vector.broadcast %98 : f32 to vector<16x4xf32>
    %104 = arith.mulf %103, %102 : vector<16x4xf32>
    %105 = arith.addf %100, %104 : vector<16x4xf32>
    %106 = vector.extract_strided_slice %96 {offsets = [0, 0], sizes = [16, 1], strides = [1, 1]} : vector<16x4xf32> to vector<16x1xf32>
    %107 = vector.broadcast %106 : vector<16x1xf32> to vector<16x4xf32>
    %108 = arith.mulf %107, %105 : vector<16x4xf32>
    %109 = arith.addf %99, %108 : vector<16x4xf32>
    %110 = vector.extract_strided_slice %9 {offsets = [0, 72], sizes = [16, 4], strides = [1, 1]} : vector<16x260xf32> to vector<16x4xf32>
    %111 = vector.extract_strided_slice %9 {offsets = [0, 76], sizes = [16, 4], strides = [1, 1]} : vector<16x260xf32> to vector<16x4xf32>
    %112 = arith.subf %111, %110 : vector<16x4xf32>
    %113 = vector.broadcast %98 : f32 to vector<16x4xf32>
    %114 = arith.mulf %113, %112 : vector<16x4xf32>
    %115 = arith.addf %110, %114 : vector<16x4xf32>
    %116 = vector.extract_strided_slice %96 {offsets = [0, 1], sizes = [16, 1], strides = [1, 1]} : vector<16x4xf32> to vector<16x1xf32>
    %117 = vector.broadcast %116 : vector<16x1xf32> to vector<16x4xf32>
    %118 = arith.mulf %117, %115 : vector<16x4xf32>
    %119 = arith.addf %109, %118 : vector<16x4xf32>
    %120 = vector.extract_strided_slice %9 {offsets = [0, 80], sizes = [16, 4], strides = [1, 1]} : vector<16x260xf32> to vector<16x4xf32>
    %121 = vector.extract_strided_slice %9 {offsets = [0, 84], sizes = [16, 4], strides = [1, 1]} : vector<16x260xf32> to vector<16x4xf32>
    %122 = arith.subf %121, %120 : vector<16x4xf32>
    %123 = vector.broadcast %98 : f32 to vector<16x4xf32>
    %124 = arith.mulf %123, %122 : vector<16x4xf32>
    %125 = arith.addf %120, %124 : vector<16x4xf32>
    %126 = vector.extract_strided_slice %96 {offsets = [0, 2], sizes = [16, 1], strides = [1, 1]} : vector<16x4xf32> to vector<16x1xf32>
    %127 = vector.broadcast %126 : vector<16x1xf32> to vector<16x4xf32>
    %128 = arith.mulf %127, %125 : vector<16x4xf32>
    %129 = arith.addf %119, %128 : vector<16x4xf32>
    %130 = vector.extract_strided_slice %9 {offsets = [0, 88], sizes = [16, 4], strides = [1, 1]} : vector<16x260xf32> to vector<16x4xf32>
    %131 = vector.extract_strided_slice %9 {offsets = [0, 92], sizes = [16, 4], strides = [1, 1]} : vector<16x260xf32> to vector<16x4xf32>
    %132 = arith.subf %131, %130 : vector<16x4xf32>
    %133 = vector.broadcast %98 : f32 to vector<16x4xf32>
    %134 = arith.mulf %133, %132 : vector<16x4xf32>
    %135 = arith.addf %130, %134 : vector<16x4xf32>
    %136 = vector.extract_strided_slice %96 {offsets = [0, 3], sizes = [16, 1], strides = [1, 1]} : vector<16x4xf32> to vector<16x1xf32>
    %137 = vector.broadcast %136 : vector<16x1xf32> to vector<16x4xf32>
    %138 = arith.mulf %137, %135 : vector<16x4xf32>
    %139 = arith.addf %129, %138 : vector<16x4xf32>
    %c3 = arith.constant 3 : index
    %140 = memref.load %arg1[%c3] : memref<8xi32, #tpu.memory_space<smem>>
    %141 = arith.sitofp %140 : i32 to f32
    %cst_9 = arith.constant 0.000000e+00 : f32
    %142 = vector.broadcast %cst_9 : f32 to vector<16x4xf32>
    %143 = vector.extract_strided_slice %9 {offsets = [0, 96], sizes = [16, 4], strides = [1, 1]} : vector<16x260xf32> to vector<16x4xf32>
    %144 = vector.extract_strided_slice %9 {offsets = [0, 100], sizes = [16, 4], strides = [1, 1]} : vector<16x260xf32> to vector<16x4xf32>
    %145 = arith.subf %144, %143 : vector<16x4xf32>
    %146 = vector.broadcast %141 : f32 to vector<16x4xf32>
    %147 = arith.mulf %146, %145 : vector<16x4xf32>
    %148 = arith.addf %143, %147 : vector<16x4xf32>
    %149 = vector.extract_strided_slice %139 {offsets = [0, 0], sizes = [16, 1], strides = [1, 1]} : vector<16x4xf32> to vector<16x1xf32>
    %150 = vector.broadcast %149 : vector<16x1xf32> to vector<16x4xf32>
    %151 = arith.mulf %150, %148 : vector<16x4xf32>
    %152 = arith.addf %142, %151 : vector<16x4xf32>
    %153 = vector.extract_strided_slice %9 {offsets = [0, 104], sizes = [16, 4], strides = [1, 1]} : vector<16x260xf32> to vector<16x4xf32>
    %154 = vector.extract_strided_slice %9 {offsets = [0, 108], sizes = [16, 4], strides = [1, 1]} : vector<16x260xf32> to vector<16x4xf32>
    %155 = arith.subf %154, %153 : vector<16x4xf32>
    %156 = vector.broadcast %141 : f32 to vector<16x4xf32>
    %157 = arith.mulf %156, %155 : vector<16x4xf32>
    %158 = arith.addf %153, %157 : vector<16x4xf32>
    %159 = vector.extract_strided_slice %139 {offsets = [0, 1], sizes = [16, 1], strides = [1, 1]} : vector<16x4xf32> to vector<16x1xf32>
    %160 = vector.broadcast %159 : vector<16x1xf32> to vector<16x4xf32>
    %161 = arith.mulf %160, %158 : vector<16x4xf32>
    %162 = arith.addf %152, %161 : vector<16x4xf32>
    %163 = vector.extract_strided_slice %9 {offsets = [0, 112], sizes = [16, 4], strides = [1, 1]} : vector<16x260xf32> to vector<16x4xf32>
    %164 = vector.extract_strided_slice %9 {offsets = [0, 116], sizes = [16, 4], strides = [1, 1]} : vector<16x260xf32> to vector<16x4xf32>
    %165 = arith.subf %164, %163 : vector<16x4xf32>
    %166 = vector.broadcast %141 : f32 to vector<16x4xf32>
    %167 = arith.mulf %166, %165 : vector<16x4xf32>
    %168 = arith.addf %163, %167 : vector<16x4xf32>
    %169 = vector.extract_strided_slice %139 {offsets = [0, 2], sizes = [16, 1], strides = [1, 1]} : vector<16x4xf32> to vector<16x1xf32>
    %170 = vector.broadcast %169 : vector<16x1xf32> to vector<16x4xf32>
    %171 = arith.mulf %170, %168 : vector<16x4xf32>
    %172 = arith.addf %162, %171 : vector<16x4xf32>
    %173 = vector.extract_strided_slice %9 {offsets = [0, 120], sizes = [16, 4], strides = [1, 1]} : vector<16x260xf32> to vector<16x4xf32>
    %174 = vector.extract_strided_slice %9 {offsets = [0, 124], sizes = [16, 4], strides = [1, 1]} : vector<16x260xf32> to vector<16x4xf32>
    %175 = arith.subf %174, %173 : vector<16x4xf32>
    %176 = vector.broadcast %141 : f32 to vector<16x4xf32>
    %177 = arith.mulf %176, %175 : vector<16x4xf32>
    %178 = arith.addf %173, %177 : vector<16x4xf32>
    %179 = vector.extract_strided_slice %139 {offsets = [0, 3], sizes = [16, 1], strides = [1, 1]} : vector<16x4xf32> to vector<16x1xf32>
    %180 = vector.broadcast %179 : vector<16x1xf32> to vector<16x4xf32>
    %181 = arith.mulf %180, %178 : vector<16x4xf32>
    %182 = arith.addf %172, %181 : vector<16x4xf32>
    %c4 = arith.constant 4 : index
    %183 = memref.load %arg1[%c4] : memref<8xi32, #tpu.memory_space<smem>>
    %184 = arith.sitofp %183 : i32 to f32
    %cst_10 = arith.constant 0.000000e+00 : f32
    %185 = vector.broadcast %cst_10 : f32 to vector<16x4xf32>
    %186 = vector.extract_strided_slice %9 {offsets = [0, 128], sizes = [16, 4], strides = [1, 1]} : vector<16x260xf32> to vector<16x4xf32>
    %187 = vector.extract_strided_slice %9 {offsets = [0, 132], sizes = [16, 4], strides = [1, 1]} : vector<16x260xf32> to vector<16x4xf32>
    %188 = arith.subf %187, %186 : vector<16x4xf32>
    %189 = vector.broadcast %184 : f32 to vector<16x4xf32>
    %190 = arith.mulf %189, %188 : vector<16x4xf32>
    %191 = arith.addf %186, %190 : vector<16x4xf32>
    %192 = vector.extract_strided_slice %182 {offsets = [0, 0], sizes = [16, 1], strides = [1, 1]} : vector<16x4xf32> to vector<16x1xf32>
    %193 = vector.broadcast %192 : vector<16x1xf32> to vector<16x4xf32>
    %194 = arith.mulf %193, %191 : vector<16x4xf32>
    %195 = arith.addf %185, %194 : vector<16x4xf32>
    %196 = vector.extract_strided_slice %9 {offsets = [0, 136], sizes = [16, 4], strides = [1, 1]} : vector<16x260xf32> to vector<16x4xf32>
    %197 = vector.extract_strided_slice %9 {offsets = [0, 140], sizes = [16, 4], strides = [1, 1]} : vector<16x260xf32> to vector<16x4xf32>
    %198 = arith.subf %197, %196 : vector<16x4xf32>
    %199 = vector.broadcast %184 : f32 to vector<16x4xf32>
    %200 = arith.mulf %199, %198 : vector<16x4xf32>
    %201 = arith.addf %196, %200 : vector<16x4xf32>
    %202 = vector.extract_strided_slice %182 {offsets = [0, 1], sizes = [16, 1], strides = [1, 1]} : vector<16x4xf32> to vector<16x1xf32>
    %203 = vector.broadcast %202 : vector<16x1xf32> to vector<16x4xf32>
    %204 = arith.mulf %203, %201 : vector<16x4xf32>
    %205 = arith.addf %195, %204 : vector<16x4xf32>
    %206 = vector.extract_strided_slice %9 {offsets = [0, 144], sizes = [16, 4], strides = [1, 1]} : vector<16x260xf32> to vector<16x4xf32>
    %207 = vector.extract_strided_slice %9 {offsets = [0, 148], sizes = [16, 4], strides = [1, 1]} : vector<16x260xf32> to vector<16x4xf32>
    %208 = arith.subf %207, %206 : vector<16x4xf32>
    %209 = vector.broadcast %184 : f32 to vector<16x4xf32>
    %210 = arith.mulf %209, %208 : vector<16x4xf32>
    %211 = arith.addf %206, %210 : vector<16x4xf32>
    %212 = vector.extract_strided_slice %182 {offsets = [0, 2], sizes = [16, 1], strides = [1, 1]} : vector<16x4xf32> to vector<16x1xf32>
    %213 = vector.broadcast %212 : vector<16x1xf32> to vector<16x4xf32>
    %214 = arith.mulf %213, %211 : vector<16x4xf32>
    %215 = arith.addf %205, %214 : vector<16x4xf32>
    %216 = vector.extract_strided_slice %9 {offsets = [0, 152], sizes = [16, 4], strides = [1, 1]} : vector<16x260xf32> to vector<16x4xf32>
    %217 = vector.extract_strided_slice %9 {offsets = [0, 156], sizes = [16, 4], strides = [1, 1]} : vector<16x260xf32> to vector<16x4xf32>
    %218 = arith.subf %217, %216 : vector<16x4xf32>
    %219 = vector.broadcast %184 : f32 to vector<16x4xf32>
    %220 = arith.mulf %219, %218 : vector<16x4xf32>
    %221 = arith.addf %216, %220 : vector<16x4xf32>
    %222 = vector.extract_strided_slice %182 {offsets = [0, 3], sizes = [16, 1], strides = [1, 1]} : vector<16x4xf32> to vector<16x1xf32>
    %223 = vector.broadcast %222 : vector<16x1xf32> to vector<16x4xf32>
    %224 = arith.mulf %223, %221 : vector<16x4xf32>
    %225 = arith.addf %215, %224 : vector<16x4xf32>
    %c5 = arith.constant 5 : index
    %226 = memref.load %arg1[%c5] : memref<8xi32, #tpu.memory_space<smem>>
    %227 = arith.sitofp %226 : i32 to f32
    %cst_11 = arith.constant 0.000000e+00 : f32
    %228 = vector.broadcast %cst_11 : f32 to vector<16x4xf32>
    %229 = vector.extract_strided_slice %9 {offsets = [0, 160], sizes = [16, 4], strides = [1, 1]} : vector<16x260xf32> to vector<16x4xf32>
    %230 = vector.extract_strided_slice %9 {offsets = [0, 164], sizes = [16, 4], strides = [1, 1]} : vector<16x260xf32> to vector<16x4xf32>
    %231 = arith.subf %230, %229 : vector<16x4xf32>
    %232 = vector.broadcast %227 : f32 to vector<16x4xf32>
    %233 = arith.mulf %232, %231 : vector<16x4xf32>
    %234 = arith.addf %229, %233 : vector<16x4xf32>
    %235 = vector.extract_strided_slice %225 {offsets = [0, 0], sizes = [16, 1], strides = [1, 1]} : vector<16x4xf32> to vector<16x1xf32>
    %236 = vector.broadcast %235 : vector<16x1xf32> to vector<16x4xf32>
    %237 = arith.mulf %236, %234 : vector<16x4xf32>
    %238 = arith.addf %228, %237 : vector<16x4xf32>
    %239 = vector.extract_strided_slice %9 {offsets = [0, 168], sizes = [16, 4], strides = [1, 1]} : vector<16x260xf32> to vector<16x4xf32>
    %240 = vector.extract_strided_slice %9 {offsets = [0, 172], sizes = [16, 4], strides = [1, 1]} : vector<16x260xf32> to vector<16x4xf32>
    %241 = arith.subf %240, %239 : vector<16x4xf32>
    %242 = vector.broadcast %227 : f32 to vector<16x4xf32>
    %243 = arith.mulf %242, %241 : vector<16x4xf32>
    %244 = arith.addf %239, %243 : vector<16x4xf32>
    %245 = vector.extract_strided_slice %225 {offsets = [0, 1], sizes = [16, 1], strides = [1, 1]} : vector<16x4xf32> to vector<16x1xf32>
    %246 = vector.broadcast %245 : vector<16x1xf32> to vector<16x4xf32>
    %247 = arith.mulf %246, %244 : vector<16x4xf32>
    %248 = arith.addf %238, %247 : vector<16x4xf32>
    %249 = vector.extract_strided_slice %9 {offsets = [0, 176], sizes = [16, 4], strides = [1, 1]} : vector<16x260xf32> to vector<16x4xf32>
    %250 = vector.extract_strided_slice %9 {offsets = [0, 180], sizes = [16, 4], strides = [1, 1]} : vector<16x260xf32> to vector<16x4xf32>
    %251 = arith.subf %250, %249 : vector<16x4xf32>
    %252 = vector.broadcast %227 : f32 to vector<16x4xf32>
    %253 = arith.mulf %252, %251 : vector<16x4xf32>
    %254 = arith.addf %249, %253 : vector<16x4xf32>
    %255 = vector.extract_strided_slice %225 {offsets = [0, 2], sizes = [16, 1], strides = [1, 1]} : vector<16x4xf32> to vector<16x1xf32>
    %256 = vector.broadcast %255 : vector<16x1xf32> to vector<16x4xf32>
    %257 = arith.mulf %256, %254 : vector<16x4xf32>
    %258 = arith.addf %248, %257 : vector<16x4xf32>
    %259 = vector.extract_strided_slice %9 {offsets = [0, 184], sizes = [16, 4], strides = [1, 1]} : vector<16x260xf32> to vector<16x4xf32>
    %260 = vector.extract_strided_slice %9 {offsets = [0, 188], sizes = [16, 4], strides = [1, 1]} : vector<16x260xf32> to vector<16x4xf32>
    %261 = arith.subf %260, %259 : vector<16x4xf32>
    %262 = vector.broadcast %227 : f32 to vector<16x4xf32>
    %263 = arith.mulf %262, %261 : vector<16x4xf32>
    %264 = arith.addf %259, %263 : vector<16x4xf32>
    %265 = vector.extract_strided_slice %225 {offsets = [0, 3], sizes = [16, 1], strides = [1, 1]} : vector<16x4xf32> to vector<16x1xf32>
    %266 = vector.broadcast %265 : vector<16x1xf32> to vector<16x4xf32>
    %267 = arith.mulf %266, %264 : vector<16x4xf32>
    %268 = arith.addf %258, %267 : vector<16x4xf32>
    %c6 = arith.constant 6 : index
    %269 = memref.load %arg1[%c6] : memref<8xi32, #tpu.memory_space<smem>>
    %270 = arith.sitofp %269 : i32 to f32
    %cst_12 = arith.constant 0.000000e+00 : f32
    %271 = vector.broadcast %cst_12 : f32 to vector<16x4xf32>
    %272 = vector.extract_strided_slice %9 {offsets = [0, 192], sizes = [16, 4], strides = [1, 1]} : vector<16x260xf32> to vector<16x4xf32>
    %273 = vector.extract_strided_slice %9 {offsets = [0, 196], sizes = [16, 4], strides = [1, 1]} : vector<16x260xf32> to vector<16x4xf32>
    %274 = arith.subf %273, %272 : vector<16x4xf32>
    %275 = vector.broadcast %270 : f32 to vector<16x4xf32>
    %276 = arith.mulf %275, %274 : vector<16x4xf32>
    %277 = arith.addf %272, %276 : vector<16x4xf32>
    %278 = vector.extract_strided_slice %268 {offsets = [0, 0], sizes = [16, 1], strides = [1, 1]} : vector<16x4xf32> to vector<16x1xf32>
    %279 = vector.broadcast %278 : vector<16x1xf32> to vector<16x4xf32>
    %280 = arith.mulf %279, %277 : vector<16x4xf32>
    %281 = arith.addf %271, %280 : vector<16x4xf32>
    %282 = vector.extract_strided_slice %9 {offsets = [0, 200], sizes = [16, 4], strides = [1, 1]} : vector<16x260xf32> to vector<16x4xf32>
    %283 = vector.extract_strided_slice %9 {offsets = [0, 204], sizes = [16, 4], strides = [1, 1]} : vector<16x260xf32> to vector<16x4xf32>
    %284 = arith.subf %283, %282 : vector<16x4xf32>
    %285 = vector.broadcast %270 : f32 to vector<16x4xf32>
    %286 = arith.mulf %285, %284 : vector<16x4xf32>
    %287 = arith.addf %282, %286 : vector<16x4xf32>
    %288 = vector.extract_strided_slice %268 {offsets = [0, 1], sizes = [16, 1], strides = [1, 1]} : vector<16x4xf32> to vector<16x1xf32>
    %289 = vector.broadcast %288 : vector<16x1xf32> to vector<16x4xf32>
    %290 = arith.mulf %289, %287 : vector<16x4xf32>
    %291 = arith.addf %281, %290 : vector<16x4xf32>
    %292 = vector.extract_strided_slice %9 {offsets = [0, 208], sizes = [16, 4], strides = [1, 1]} : vector<16x260xf32> to vector<16x4xf32>
    %293 = vector.extract_strided_slice %9 {offsets = [0, 212], sizes = [16, 4], strides = [1, 1]} : vector<16x260xf32> to vector<16x4xf32>
    %294 = arith.subf %293, %292 : vector<16x4xf32>
    %295 = vector.broadcast %270 : f32 to vector<16x4xf32>
    %296 = arith.mulf %295, %294 : vector<16x4xf32>
    %297 = arith.addf %292, %296 : vector<16x4xf32>
    %298 = vector.extract_strided_slice %268 {offsets = [0, 2], sizes = [16, 1], strides = [1, 1]} : vector<16x4xf32> to vector<16x1xf32>
    %299 = vector.broadcast %298 : vector<16x1xf32> to vector<16x4xf32>
    %300 = arith.mulf %299, %297 : vector<16x4xf32>
    %301 = arith.addf %291, %300 : vector<16x4xf32>
    %302 = vector.extract_strided_slice %9 {offsets = [0, 216], sizes = [16, 4], strides = [1, 1]} : vector<16x260xf32> to vector<16x4xf32>
    %303 = vector.extract_strided_slice %9 {offsets = [0, 220], sizes = [16, 4], strides = [1, 1]} : vector<16x260xf32> to vector<16x4xf32>
    %304 = arith.subf %303, %302 : vector<16x4xf32>
    %305 = vector.broadcast %270 : f32 to vector<16x4xf32>
    %306 = arith.mulf %305, %304 : vector<16x4xf32>
    %307 = arith.addf %302, %306 : vector<16x4xf32>
    %308 = vector.extract_strided_slice %268 {offsets = [0, 3], sizes = [16, 1], strides = [1, 1]} : vector<16x4xf32> to vector<16x1xf32>
    %309 = vector.broadcast %308 : vector<16x1xf32> to vector<16x4xf32>
    %310 = arith.mulf %309, %307 : vector<16x4xf32>
    %311 = arith.addf %301, %310 : vector<16x4xf32>
    %c7 = arith.constant 7 : index
    %312 = memref.load %arg1[%c7] : memref<8xi32, #tpu.memory_space<smem>>
    %313 = arith.sitofp %312 : i32 to f32
    %cst_13 = arith.constant 0.000000e+00 : f32
    %314 = vector.broadcast %cst_13 : f32 to vector<16x4xf32>
    %315 = vector.extract_strided_slice %9 {offsets = [0, 224], sizes = [16, 4], strides = [1, 1]} : vector<16x260xf32> to vector<16x4xf32>
    %316 = vector.extract_strided_slice %9 {offsets = [0, 228], sizes = [16, 4], strides = [1, 1]} : vector<16x260xf32> to vector<16x4xf32>
    %317 = arith.subf %316, %315 : vector<16x4xf32>
    %318 = vector.broadcast %313 : f32 to vector<16x4xf32>
    %319 = arith.mulf %318, %317 : vector<16x4xf32>
    %320 = arith.addf %315, %319 : vector<16x4xf32>
    %321 = vector.extract_strided_slice %311 {offsets = [0, 0], sizes = [16, 1], strides = [1, 1]} : vector<16x4xf32> to vector<16x1xf32>
    %322 = vector.broadcast %321 : vector<16x1xf32> to vector<16x4xf32>
    %323 = arith.mulf %322, %320 : vector<16x4xf32>
    %324 = arith.addf %314, %323 : vector<16x4xf32>
    %325 = vector.extract_strided_slice %9 {offsets = [0, 232], sizes = [16, 4], strides = [1, 1]} : vector<16x260xf32> to vector<16x4xf32>
    %326 = vector.extract_strided_slice %9 {offsets = [0, 236], sizes = [16, 4], strides = [1, 1]} : vector<16x260xf32> to vector<16x4xf32>
    %327 = arith.subf %326, %325 : vector<16x4xf32>
    %328 = vector.broadcast %313 : f32 to vector<16x4xf32>
    %329 = arith.mulf %328, %327 : vector<16x4xf32>
    %330 = arith.addf %325, %329 : vector<16x4xf32>
    %331 = vector.extract_strided_slice %311 {offsets = [0, 1], sizes = [16, 1], strides = [1, 1]} : vector<16x4xf32> to vector<16x1xf32>
    %332 = vector.broadcast %331 : vector<16x1xf32> to vector<16x4xf32>
    %333 = arith.mulf %332, %330 : vector<16x4xf32>
    %334 = arith.addf %324, %333 : vector<16x4xf32>
    %335 = vector.extract_strided_slice %9 {offsets = [0, 240], sizes = [16, 4], strides = [1, 1]} : vector<16x260xf32> to vector<16x4xf32>
    %336 = vector.extract_strided_slice %9 {offsets = [0, 244], sizes = [16, 4], strides = [1, 1]} : vector<16x260xf32> to vector<16x4xf32>
    %337 = arith.subf %336, %335 : vector<16x4xf32>
    %338 = vector.broadcast %313 : f32 to vector<16x4xf32>
    %339 = arith.mulf %338, %337 : vector<16x4xf32>
    %340 = arith.addf %335, %339 : vector<16x4xf32>
    %341 = vector.extract_strided_slice %311 {offsets = [0, 2], sizes = [16, 1], strides = [1, 1]} : vector<16x4xf32> to vector<16x1xf32>
    %342 = vector.broadcast %341 : vector<16x1xf32> to vector<16x4xf32>
    %343 = arith.mulf %342, %340 : vector<16x4xf32>
    %344 = arith.addf %334, %343 : vector<16x4xf32>
    %345 = vector.extract_strided_slice %9 {offsets = [0, 248], sizes = [16, 4], strides = [1, 1]} : vector<16x260xf32> to vector<16x4xf32>
    %346 = vector.extract_strided_slice %9 {offsets = [0, 252], sizes = [16, 4], strides = [1, 1]} : vector<16x260xf32> to vector<16x4xf32>
    %347 = arith.subf %346, %345 : vector<16x4xf32>
    %348 = vector.broadcast %313 : f32 to vector<16x4xf32>
    %349 = arith.mulf %348, %347 : vector<16x4xf32>
    %350 = arith.addf %345, %349 : vector<16x4xf32>
    %351 = vector.extract_strided_slice %311 {offsets = [0, 3], sizes = [16, 1], strides = [1, 1]} : vector<16x4xf32> to vector<16x1xf32>
    %352 = vector.broadcast %351 : vector<16x1xf32> to vector<16x4xf32>
    %353 = arith.mulf %352, %350 : vector<16x4xf32>
    %354 = arith.addf %344, %353 : vector<16x4xf32>
    %c0_14 = arith.constant 0 : index
    %c0_15 = arith.constant 0 : index
    %355 = vector.load %arg3[%c0_14, %c0_15] : memref<8x128xf32, #tpu.memory_space<vmem>>, vector<4x128xf32>
    %c4_16 = arith.constant 4 : index
    %c0_17 = arith.constant 0 : index
    %356 = vector.load %arg3[%c4_16, %c0_17] : memref<8x128xf32, #tpu.memory_space<vmem>>, vector<4x128xf32>
    %cst_18 = arith.constant 5.000000e-01 : f32
    %357 = vector.broadcast %cst_18 : f32 to vector<4x128xf32>
    %358 = arith.mulf %357, %356 : vector<4x128xf32>
    %359 = math.exp %358 : vector<4x128xf32>
    %cst_19 = arith.constant 0.000000e+00 : f32
    %360 = vector.broadcast %cst_19 : f32 to vector<16x128xf32>
    %361 = vector.extract_strided_slice %355 {offsets = [0, 0], sizes = [1, 128], strides = [1, 1]} : vector<4x128xf32> to vector<1x128xf32>
    %c0_20 = arith.constant 0 : index
    %c0_21 = arith.constant 0 : index
    %362 = vector.load %arg5[%c0_20, %c0_21] : memref<16x512xf32, #tpu.memory_space<vmem>>, vector<16x128xf32>
    %363 = vector.extract_strided_slice %359 {offsets = [0, 0], sizes = [1, 128], strides = [1, 1]} : vector<4x128xf32> to vector<1x128xf32>
    %364 = vector.broadcast %363 : vector<1x128xf32> to vector<16x128xf32>
    %365 = arith.mulf %362, %364 : vector<16x128xf32>
    %366 = vector.broadcast %361 : vector<1x128xf32> to vector<16x128xf32>
    %367 = arith.addf %366, %365 : vector<16x128xf32>
    %368 = vector.extract_strided_slice %354 {offsets = [0, 0], sizes = [16, 1], strides = [1, 1]} : vector<16x4xf32> to vector<16x1xf32>
    %369 = vector.broadcast %368 : vector<16x1xf32> to vector<16x128xf32>
    %370 = arith.mulf %369, %367 : vector<16x128xf32>
    %371 = arith.addf %360, %370 : vector<16x128xf32>
    %372 = vector.extract_strided_slice %355 {offsets = [1, 0], sizes = [1, 128], strides = [1, 1]} : vector<4x128xf32> to vector<1x128xf32>
    %c0_22 = arith.constant 0 : index
    %c128 = arith.constant 128 : index
    %373 = vector.load %arg5[%c0_22, %c128] : memref<16x512xf32, #tpu.memory_space<vmem>>, vector<16x128xf32>
    %374 = vector.extract_strided_slice %359 {offsets = [1, 0], sizes = [1, 128], strides = [1, 1]} : vector<4x128xf32> to vector<1x128xf32>
    %375 = vector.broadcast %374 : vector<1x128xf32> to vector<16x128xf32>
    %376 = arith.mulf %373, %375 : vector<16x128xf32>
    %377 = vector.broadcast %372 : vector<1x128xf32> to vector<16x128xf32>
    %378 = arith.addf %377, %376 : vector<16x128xf32>
    %379 = vector.extract_strided_slice %354 {offsets = [0, 1], sizes = [16, 1], strides = [1, 1]} : vector<16x4xf32> to vector<16x1xf32>
    %380 = vector.broadcast %379 : vector<16x1xf32> to vector<16x128xf32>
    %381 = arith.mulf %380, %378 : vector<16x128xf32>
    %382 = arith.addf %371, %381 : vector<16x128xf32>
    %383 = vector.extract_strided_slice %355 {offsets = [2, 0], sizes = [1, 128], strides = [1, 1]} : vector<4x128xf32> to vector<1x128xf32>
    %c0_23 = arith.constant 0 : index
    %c256 = arith.constant 256 : index
    %384 = vector.load %arg5[%c0_23, %c256] : memref<16x512xf32, #tpu.memory_space<vmem>>, vector<16x128xf32>
    %385 = vector.extract_strided_slice %359 {offsets = [2, 0], sizes = [1, 128], strides = [1, 1]} : vector<4x128xf32> to vector<1x128xf32>
    %386 = vector.broadcast %385 : vector<1x128xf32> to vector<16x128xf32>
    %387 = arith.mulf %384, %386 : vector<16x128xf32>
    %388 = vector.broadcast %383 : vector<1x128xf32> to vector<16x128xf32>
    %389 = arith.addf %388, %387 : vector<16x128xf32>
    %390 = vector.extract_strided_slice %354 {offsets = [0, 2], sizes = [16, 1], strides = [1, 1]} : vector<16x4xf32> to vector<16x1xf32>
    %391 = vector.broadcast %390 : vector<16x1xf32> to vector<16x128xf32>
    %392 = arith.mulf %391, %389 : vector<16x128xf32>
    %393 = arith.addf %382, %392 : vector<16x128xf32>
    %394 = vector.extract_strided_slice %355 {offsets = [3, 0], sizes = [1, 128], strides = [1, 1]} : vector<4x128xf32> to vector<1x128xf32>
    %c0_24 = arith.constant 0 : index
    %c384 = arith.constant 384 : index
    %395 = vector.load %arg5[%c0_24, %c384] : memref<16x512xf32, #tpu.memory_space<vmem>>, vector<16x128xf32>
    %396 = vector.extract_strided_slice %359 {offsets = [3, 0], sizes = [1, 128], strides = [1, 1]} : vector<4x128xf32> to vector<1x128xf32>
    %397 = vector.broadcast %396 : vector<1x128xf32> to vector<16x128xf32>
    %398 = arith.mulf %395, %397 : vector<16x128xf32>
    %399 = vector.broadcast %394 : vector<1x128xf32> to vector<16x128xf32>
    %400 = arith.addf %399, %398 : vector<16x128xf32>
    %401 = vector.extract_strided_slice %354 {offsets = [0, 3], sizes = [16, 1], strides = [1, 1]} : vector<16x4xf32> to vector<16x1xf32>
    %402 = vector.broadcast %401 : vector<16x1xf32> to vector<16x128xf32>
    %403 = arith.mulf %402, %400 : vector<16x128xf32>
    %404 = arith.addf %393, %403 : vector<16x128xf32>
    %c0_25 = arith.constant 0 : index
    %c0_26 = arith.constant 0 : index
    %405 = vector.load %arg6[%c0_25, %c0_26] : memref<16x128xf32, #tpu.memory_space<vmem>>, vector<16x128xf32>
    tpu.vector_store %arg6[%c0_25, %c0_26], %404 {strides = array<i32>} : memref<16x128xf32, #tpu.memory_space<vmem>>, vector<16x128xf32>,
    return
  }
  func.func @transform_0(%arg0: i32, %arg1: memref<8xi32, #tpu.memory_space<smem>>) -> (i32, i32) {
    %c0_i32 = arith.constant 0 : i32
    %c0_i32_0 = arith.constant 0 : i32
    %c0_i32_1 = arith.constant 0 : i32
    return %c0_i32, %c0_i32_0 : i32, i32
  }
  func.func @transform_1(%arg0: i32, %arg1: memref<8xi32, #tpu.memory_space<smem>>) -> (i32, i32) {
    %c0_i32 = arith.constant 0 : i32
    %c0_i32_0 = arith.constant 0 : i32
    %c0_i32_1 = arith.constant 0 : i32
    return %c0_i32, %c0_i32_0 : i32, i32
  }
  func.func @transform_2(%arg0: i32, %arg1: memref<8xi32, #tpu.memory_space<smem>>) -> (i32, i32) {
    %c0_i32 = arith.constant 0 : i32
    %c0_i32_0 = arith.constant 0 : i32
    return %arg0, %c0_i32 : i32, i32
  }
  func.func @transform_3(%arg0: i32, %arg1: memref<8xi32, #tpu.memory_space<smem>>) -> (i32, i32) {
    %c0_i32 = arith.constant 0 : i32
    %c0_i32_0 = arith.constant 0 : i32
    return %arg0, %c0_i32 : i32, i32
  }
  func.func @transform_4(%arg0: i32, %arg1: memref<8xi32, #tpu.memory_space<smem>>) -> (i32, i32) {
    %c0_i32 = arith.constant 0 : i32
    %c0_i32_0 = arith.constant 0 : i32
    return %arg0, %c0_i32 : i32, i32
  }
}

</mosaic_0001>

<llo_original>
// kernel: bayesian_tn_forward.1
$region0: #{bayesian_tn_forward.1}
  #allocation0 [shape = 'u32[]', space=smem, size = 0x4, offset = 0x4, fixed_abs, tag = 'smem constant byte address 0x4 - core index']
  #allocation1 [shape = 'u32[72,128]{1,0:T(1,128)}', space=vmem, size = 0x9000, scoped, tag = 'internal scratch']
  #allocation2 [shape = 's32[1]{0}', space=sflag, size = 0x4, scoped, tag = 'scoped memory for bayesian_tn_forward.1']
  #allocation3 [shape = 'u8[512]{0}', space=smem, size = 0x200, scoped, tag = 'prefetched SMEM operand 0']
  %s0 = inlined_call_operand.vmem [shape: s32[8], index: 0, kind: input, shape index: {}]
  %s1 = inlined_call_operand.vmem [shape: f32[2,260], index: 1, kind: input, shape index: {}]
  %s2 = inlined_call_operand.vmem [shape: f32[8,128], index: 2, kind: input, shape index: {}]
  %s3 = inlined_call_operand.vmem [shape: f32[16,260], index: 3, kind: input, shape index: {}]
  %s4 = inlined_call_operand.vmem [shape: f32[16,512], index: 4, kind: input, shape index: {}]
  %s5 = inlined_call_operand.vmem [shape: f32[16,128], index: 5, kind: output, shape index: {}]
  %s6 = sld [smem:[#allocation0]]
  $region26: #{bayesian_tn_forward.1} parent=0
    _
  %s8 = ssub.s32 1, %s6
  %s9 = scalar_select 0, %s8, %s6
  %s11 = sshll.u32 %s0, 4
  %s12 = int_to_ptr.vmem [resolvable:$true] %s11
  %14 = dma.vmem_to_smem %s12, 16, [#allocation3], [#allocation2]
  %16 = dma.done [#allocation2], 16
  %17 = sfence
  // Predicated region
  $region2: #{bayesian_tn_forward.1} parent=0 // pred_check
    _
  $region3: #{bayesian_tn_forward.1} parent=0 // pred_check_branch
    %19 = sbr.rel (0) target = $region5
  $region4: #{bayesian_tn_forward.1} parent=0 // pred_region
    _
  $region5: #{bayesian_tn_forward.1} parent=0 // pred_fallthru
    _
  // Predicated region
  $region6: #{bayesian_tn_forward.1} parent=0 // pred_check
    _
  $region7: #{bayesian_tn_forward.1} parent=0 // pred_check_branch
    %21 = sbr.rel (0) target = $region9
  $region8: #{bayesian_tn_forward.1} parent=0 // pred_region
    _
  $region9: #{bayesian_tn_forward.1} parent=0 // pred_fallthru
    _
  // Predicated region
  $region10: #{bayesian_tn_forward.1} parent=0 // pred_check
    _
  $region11: #{bayesian_tn_forward.1} parent=0 // pred_check_branch
    %23 = sbr.rel (0) target = $region13
  $region12: #{bayesian_tn_forward.1} parent=0 // pred_region
    _
  $region13: #{bayesian_tn_forward.1} parent=0 // pred_fallthru
    _
  // Predicated region
  $region14: #{bayesian_tn_forward.1} parent=0 // pred_check
    _
  $region15: #{bayesian_tn_forward.1} parent=0 // pred_check_branch
    %25 = sbr.rel (0) target = $region17
  $region16: #{bayesian_tn_forward.1} parent=0 // pred_region
    _
  $region17: #{bayesian_tn_forward.1} parent=0 // pred_fallthru
    _
  %s26 = scalar_lea.vmem %s1, 1
  %v27 = vld [vmem:[%s26] ss:$2 sm:$0x7]
  %v28 = vmul.f32 %v27, 0.5
  %v29 = vmul.f32 %v28, 1.442695
  %v30 = vpow.pop %v29
  %v31 = vld [vmem:[%s1] ss:$2 sm:$0x7]
  %v32 = vld [vmem:[%s3] sm:$0xff]
  %v33 = vld [vmem:[%s3 + $0x8] sm:$0xff]
  %v34 = vld [vmem:[%s3 + $0x10] sm:$0xff]
  %v35 = vld [vmem:[%s3 + $0x18] sm:$0xff]
  %v36 = vld [vmem:[%s3 + $0x20] sm:$0xff]
  %v37 = vld [vmem:[%s3 + $0x28] sm:$0xff]
  %v39 = vperm.slane %v30, 0
  %v40 = vperm.slane %v30, 1
  %v41 = vperm.slane %v30, 2
  %v45 = vmul.f32 %v32, %v39
  %v46 = vmul.f32 %v33, %v40
  %v47 = vmul.f32 %v34, %v41
  %v48 = vmul.f32 %v35, %v39
  %v49 = vmul.f32 %v36, %v40
  %v50 = vmul.f32 %v37, %v41
  %v52 = vperm.slane %v31, 0
  %v53 = vperm.slane %v31, 1
  %v54 = vperm.slane %v31, 2
  %v58 = vadd.f32 %v52, %v45
  %v59 = vadd.f32 %v53, %v46
  %v60 = vadd.f32 %v54, %v47
  %v61 = vadd.f32 %v52, %v48
  %v62 = vadd.f32 %v53, %v49
  %v63 = vadd.f32 %v54, %v50
  %s64 = sld [smem:[#allocation3]]
  %s65 = scvt.s32.f32 %s64
  %68 = vrot.lane.b32.xlu0 %v58, 4
  %v69 = vpop.permute.xlu0 %68
  %70 = vrot.lane.b32.xlu0 %v61, 4
  %v71 = vpop.permute.xlu0 %70
  %v74 = vsub.f32 %v58, %v69
  %v75 = vsub.f32 %v61, %v71
  %v76 = vstv %s65
  %v77 = vmul.f32 %v76, %v74
  %v78 = vmul.f32 %v76, %v75
  %81 = vrot.lane.b32.xlu0 %v77, 124
  %v82 = vpop.permute.xlu0 %81
  %83 = vrot.lane.b32.xlu0 %v78, 124
  %v84 = vpop.permute.xlu0 %83
  %v87 = vadd.f32 %v58, %v82
  %v88 = vadd.f32 %v61, %v84
  %90 = vset.pattern.permute.xlu0 0
  %91 = vperm.xlu0 %90, %v60
  %v92 = vpop.permute.xlu0 %91
  %95 = vset.pattern.permute.xlu0 0
  %96 = vperm.xlu0 %95, %v63
  %v97 = vpop.permute.xlu0 %96
  %v99 = vmul.f32 %v92, %v87
  %v100 = vmul.f32 %v97, %v88
  %v101 = vadd.f32 %v99, 0.0
  %v102 = vadd.f32 %v100, 0.0
  %103 = vset.pattern.permute.xlu0 1
  %104 = vperm.xlu0 %103, %v60
  %v105 = vpop.permute.xlu0 %104
  %107 = vset.pattern.permute.xlu0 1
  %108 = vperm.xlu0 %107, %v63
  %v109 = vpop.permute.xlu0 %108
  %v111 = vmul.f32 %v105, %v87
  %v112 = vmul.f32 %v109, %v88
  %115 = vrot.lane.b32.xlu0 %v111, 120
  %v116 = vpop.permute.xlu0 %115
  %117 = vrot.lane.b32.xlu0 %v112, 120
  %v118 = vpop.permute.xlu0 %117
  %v121 = vadd.f32 %v101, %v116
  %v122 = vadd.f32 %v102, %v118
  %123 = vset.pattern.permute.xlu0 2
  %124 = vperm.xlu0 %123, %v60
  %v125 = vpop.permute.xlu0 %124
  %127 = vset.pattern.permute.xlu0 2
  %128 = vperm.xlu0 %127, %v63
  %v129 = vpop.permute.xlu0 %128
  %v131 = vmul.f32 %v125, %v87
  %v132 = vmul.f32 %v129, %v88
  %135 = vrot.lane.b32.xlu0 %v131, 112
  %v136 = vpop.permute.xlu0 %135
  %137 = vrot.lane.b32.xlu0 %v132, 112
  %v138 = vpop.permute.xlu0 %137
  %v141 = vadd.f32 %v121, %v136
  %v142 = vadd.f32 %v122, %v138
  %143 = vset.pattern.permute.xlu0 3
  %144 = vperm.xlu0 %143, %v60
  %v145 = vpop.permute.xlu0 %144
  %147 = vset.pattern.permute.xlu0 3
  %148 = vperm.xlu0 %147, %v63
  %v149 = vpop.permute.xlu0 %148
  %v151 = vmul.f32 %v145, %v87
  %v152 = vmul.f32 %v149, %v88
  %155 = vrot.lane.b32.xlu0 %v151, 104
  %v156 = vpop.permute.xlu0 %155
  %157 = vrot.lane.b32.xlu0 %v152, 104
  %v158 = vpop.permute.xlu0 %157
  %v161 = vadd.f32 %v141, %v156
  %v162 = vadd.f32 %v142, %v158
  %s163 = sld [smem:[#allocation3 + $0x1]]
  %s164 = scvt.s32.f32 %s163
  %v165 = vstv %s164
  %v166 = vmul.f32 %v165, %v74
  %v167 = vmul.f32 %v165, %v75
  %170 = vrot.lane.b32.xlu0 %v166, 124
  %v171 = vpop.permute.xlu0 %170
  %172 = vrot.lane.b32.xlu0 %v167, 124
  %v173 = vpop.permute.xlu0 %172
  %v176 = vadd.f32 %v58, %v171
  %v177 = vadd.f32 %v61, %v173
  %179 = vset.pattern.permute.xlu0 0
  %180 = vperm.xlu0 %179, %v161
  %v181 = vpop.permute.xlu0 %180
  %184 = vset.pattern.permute.xlu0 0
  %185 = vperm.xlu0 %184, %v162
  %v186 = vpop.permute.xlu0 %185
  %v188 = vmul.f32 %v181, %v176
  %v189 = vmul.f32 %v186, %v177
  %v190 = vadd.f32 %v188, 0.0
  %v191 = vadd.f32 %v189, 0.0
  %192 = vset.pattern.permute.xlu0 1
  %193 = vperm.xlu0 %192, %v161
  %v194 = vpop.permute.xlu0 %193
  %196 = vset.pattern.permute.xlu0 1
  %197 = vperm.xlu0 %196, %v162
  %v198 = vpop.permute.xlu0 %197
  %v200 = vmul.f32 %v194, %v176
  %v201 = vmul.f32 %v198, %v177
  %204 = vrot.lane.b32.xlu0 %v200, 120
  %v205 = vpop.permute.xlu0 %204
  %206 = vrot.lane.b32.xlu0 %v201, 120
  %v207 = vpop.permute.xlu0 %206
  %v210 = vadd.f32 %v190, %v205
  %v211 = vadd.f32 %v191, %v207
  %212 = vset.pattern.permute.xlu0 2
  %213 = vperm.xlu0 %212, %v161
  %v214 = vpop.permute.xlu0 %213
  %216 = vset.pattern.permute.xlu0 2
  %217 = vperm.xlu0 %216, %v162
  %v218 = vpop.permute.xlu0 %217
  %v220 = vmul.f32 %v214, %v176
  %v221 = vmul.f32 %v218, %v177
  %224 = vrot.lane.b32.xlu0 %v220, 112
  %v225 = vpop.permute.xlu0 %224
  %226 = vrot.lane.b32.xlu0 %v221, 112
  %v227 = vpop.permute.xlu0 %226
  %v230 = vadd.f32 %v210, %v225
  %v231 = vadd.f32 %v211, %v227
  %232 = vset.pattern.permute.xlu0 3
  %233 = vperm.xlu0 %232, %v161
  %v234 = vpop.permute.xlu0 %233
  %236 = vset.pattern.permute.xlu0 3
  %237 = vperm.xlu0 %236, %v162
  %v238 = vpop.permute.xlu0 %237
  %v240 = vmul.f32 %v234, %v176
  %v241 = vmul.f32 %v238, %v177
  %244 = vrot.lane.b32.xlu0 %v240, 104
  %v245 = vpop.permute.xlu0 %244
  %246 = vrot.lane.b32.xlu0 %v241, 104
  %v247 = vpop.permute.xlu0 %246
  %v250 = vadd.f32 %v230, %v245
  %v251 = vadd.f32 %v231, %v247
  %s252 = sld [smem:[#allocation3 + $0x2]]
  %s253 = scvt.s32.f32 %s252
  %v254 = vstv %s253
  %v255 = vmul.f32 %v254, %v74
  %v256 = vmul.f32 %v254, %v75
  %259 = vrot.lane.b32.xlu0 %v255, 124
  %v260 = vpop.permute.xlu0 %259
  %261 = vrot.lane.b32.xlu0 %v256, 124
  %v262 = vpop.permute.xlu0 %261
  %v265 = vadd.f32 %v58, %v260
  %v266 = vadd.f32 %v61, %v262
  %268 = vset.pattern.permute.xlu0 32
  %269 = vperm.xlu0 %268, %v250
  %v270 = vpop.permute.xlu0 %269
  %273 = vset.pattern.permute.xlu0 32
  %274 = vperm.xlu0 %273, %v251
  %v275 = vpop.permute.xlu0 %274
  %v277 = vmul.f32 %v270, %v265
  %v278 = vmul.f32 %v275, %v266
  %v279 = vadd.f32 %v277, 0.0
  %v280 = vadd.f32 %v278, 0.0
  %281 = vset.pattern.permute.xlu0 33
  %282 = vperm.xlu0 %281, %v250
  %v283 = vpop.permute.xlu0 %282
  %285 = vset.pattern.permute.xlu0 33
  %286 = vperm.xlu0 %285, %v251
  %v287 = vpop.permute.xlu0 %286
  %v289 = vmul.f32 %v283, %v265
  %v290 = vmul.f32 %v287, %v266
  %293 = vrot.lane.b32.xlu0 %v289, 120
  %v294 = vpop.permute.xlu0 %293
  %295 = vrot.lane.b32.xlu0 %v290, 120
  %v296 = vpop.permute.xlu0 %295
  %v299 = vadd.f32 %v279, %v294
  %v300 = vadd.f32 %v280, %v296
  %301 = vset.pattern.permute.xlu0 34
  %302 = vperm.xlu0 %301, %v250
  %v303 = vpop.permute.xlu0 %302
  %305 = vset.pattern.permute.xlu0 34
  %306 = vperm.xlu0 %305, %v251
  %v307 = vpop.permute.xlu0 %306
  %v309 = vmul.f32 %v303, %v265
  %v310 = vmul.f32 %v307, %v266
  %313 = vrot.lane.b32.xlu0 %v309, 112
  %v314 = vpop.permute.xlu0 %313
  %315 = vrot.lane.b32.xlu0 %v310, 112
  %v316 = vpop.permute.xlu0 %315
  %v319 = vadd.f32 %v299, %v314
  %v320 = vadd.f32 %v300, %v316
  %321 = vset.pattern.permute.xlu0 35
  %322 = vperm.xlu0 %321, %v250
  %v323 = vpop.permute.xlu0 %322
  %325 = vset.pattern.permute.xlu0 35
  %326 = vperm.xlu0 %325, %v251
  %v327 = vpop.permute.xlu0 %326
  %v329 = vmul.f32 %v323, %v265
  %v330 = vmul.f32 %v327, %v266
  %333 = vrot.lane.b32.xlu0 %v329, 104
  %v334 = vpop.permute.xlu0 %333
  %335 = vrot.lane.b32.xlu0 %v330, 104
  %v336 = vpop.permute.xlu0 %335
  %v339 = vadd.f32 %v319, %v334
  %v340 = vadd.f32 %v320, %v336
  %s341 = sld [smem:[#allocation3 + $0x3]]
  %s342 = scvt.s32.f32 %s341
  %v343 = vstv %s342
  %v344 = vmul.f32 %v343, %v74
  %v345 = vmul.f32 %v343, %v75
  %348 = vrot.lane.b32.xlu0 %v344, 124
  %v349 = vpop.permute.xlu0 %348
  %350 = vrot.lane.b32.xlu0 %v345, 124
  %v351 = vpop.permute.xlu0 %350
  %v354 = vadd.f32 %v58, %v349
  %v355 = vadd.f32 %v61, %v351
  %357 = vset.pattern.permute.xlu0 64
  %358 = vperm.xlu0 %357, %v339
  %v359 = vpop.permute.xlu0 %358
  %362 = vset.pattern.permute.xlu0 64
  %363 = vperm.xlu0 %362, %v340
  %v364 = vpop.permute.xlu0 %363
  %v366 = vmul.f32 %v359, %v354
  %v367 = vmul.f32 %v364, %v355
  %v368 = vadd.f32 %v366, 0.0
  %v369 = vadd.f32 %v367, 0.0
  %370 = vset.pattern.permute.xlu0 65
  %371 = vperm.xlu0 %370, %v339
  %v372 = vpop.permute.xlu0 %371
  %374 = vset.pattern.permute.xlu0 65
  %375 = vperm.xlu0 %374, %v340
  %v376 = vpop.permute.xlu0 %375
  %v378 = vmul.f32 %v372, %v354
  %v379 = vmul.f32 %v376, %v355
  %382 = vrot.lane.b32.xlu0 %v378, 120
  %v383 = vpop.permute.xlu0 %382
  %384 = vrot.lane.b32.xlu0 %v379, 120
  %v385 = vpop.permute.xlu0 %384
  %v388 = vadd.f32 %v368, %v383
  %v389 = vadd.f32 %v369, %v385
  %390 = vset.pattern.permute.xlu0 66
  %391 = vperm.xlu0 %390, %v339
  %v392 = vpop.permute.xlu0 %391
  %394 = vset.pattern.permute.xlu0 66
  %395 = vperm.xlu0 %394, %v340
  %v396 = vpop.permute.xlu0 %395
  %v398 = vmul.f32 %v392, %v354
  %v399 = vmul.f32 %v396, %v355
  %402 = vrot.lane.b32.xlu0 %v398, 112
  %v403 = vpop.permute.xlu0 %402
  %404 = vrot.lane.b32.xlu0 %v399, 112
  %v405 = vpop.permute.xlu0 %404
  %v408 = vadd.f32 %v388, %v403
  %v409 = vadd.f32 %v389, %v405
  %410 = vset.pattern.permute.xlu0 67
  %411 = vperm.xlu0 %410, %v339
  %v412 = vpop.permute.xlu0 %411
  %414 = vset.pattern.permute.xlu0 67
  %415 = vperm.xlu0 %414, %v340
  %v416 = vpop.permute.xlu0 %415
  %v418 = vmul.f32 %v412, %v354
  %v419 = vmul.f32 %v416, %v355
  %422 = vrot.lane.b32.xlu0 %v418, 104
  %v423 = vpop.permute.xlu0 %422
  %424 = vrot.lane.b32.xlu0 %v419, 104
  %v425 = vpop.permute.xlu0 %424
  %v428 = vadd.f32 %v408, %v423
  %v429 = vadd.f32 %v409, %v425
  %s430 = sld [smem:[#allocation3 + $0x4]]
  %s431 = scvt.s32.f32 %s430
  %434 = vrot.lane.b32.xlu0 %v59, 4
  %v435 = vpop.permute.xlu0 %434
  %436 = vrot.lane.b32.xlu0 %v62, 4
  %v437 = vpop.permute.xlu0 %436
  %v440 = vsub.f32 %v59, %v435
  %v441 = vsub.f32 %v62, %v437
  %v442 = vstv %s431
  %v443 = vmul.f32 %v442, %v440
  %v444 = vmul.f32 %v442, %v441
  %447 = vrot.lane.b32.xlu0 %v443, 124
  %v448 = vpop.permute.xlu0 %447
  %449 = vrot.lane.b32.xlu0 %v444, 124
  %v450 = vpop.permute.xlu0 %449
  %v453 = vadd.f32 %v59, %v448
  %v454 = vadd.f32 %v62, %v450
  %456 = vset.pattern.permute.xlu0 96
  %457 = vperm.xlu0 %456, %v428
  %v458 = vpop.permute.xlu0 %457
  %461 = vset.pattern.permute.xlu0 96
  %462 = vperm.xlu0 %461, %v429
  %v463 = vpop.permute.xlu0 %462
  %v465 = vmul.f32 %v458, %v453
  %v466 = vmul.f32 %v463, %v454
  %v467 = vadd.f32 %v465, 0.0
  %v468 = vadd.f32 %v466, 0.0
  %469 = vset.pattern.permute.xlu0 97
  %470 = vperm.xlu0 %469, %v428
  %v471 = vpop.permute.xlu0 %470
  %473 = vset.pattern.permute.xlu0 97
  %474 = vperm.xlu0 %473, %v429
  %v475 = vpop.permute.xlu0 %474
  %v477 = vmul.f32 %v471, %v453
  %v478 = vmul.f32 %v475, %v454
  %481 = vrot.lane.b32.xlu0 %v477, 120
  %v482 = vpop.permute.xlu0 %481
  %483 = vrot.lane.b32.xlu0 %v478, 120
  %v484 = vpop.permute.xlu0 %483
  %v487 = vadd.f32 %v467, %v482
  %v488 = vadd.f32 %v468, %v484
  %489 = vset.pattern.permute.xlu0 98
  %490 = vperm.xlu0 %489, %v428
  %v491 = vpop.permute.xlu0 %490
  %493 = vset.pattern.permute.xlu0 98
  %494 = vperm.xlu0 %493, %v429
  %v495 = vpop.permute.xlu0 %494
  %v497 = vmul.f32 %v491, %v453
  %v498 = vmul.f32 %v495, %v454
  %501 = vrot.lane.b32.xlu0 %v497, 112
  %v502 = vpop.permute.xlu0 %501
  %503 = vrot.lane.b32.xlu0 %v498, 112
  %v504 = vpop.permute.xlu0 %503
  %v507 = vadd.f32 %v487, %v502
  %v508 = vadd.f32 %v488, %v504
  %509 = vset.pattern.permute.xlu0 99
  %510 = vperm.xlu0 %509, %v428
  %v511 = vpop.permute.xlu0 %510
  %513 = vset.pattern.permute.xlu0 99
  %514 = vperm.xlu0 %513, %v429
  %v515 = vpop.permute.xlu0 %514
  %v517 = vmul.f32 %v511, %v453
  %v518 = vmul.f32 %v515, %v454
  %521 = vrot.lane.b32.xlu0 %v517, 104
  %v522 = vpop.permute.xlu0 %521
  %523 = vrot.lane.b32.xlu0 %v518, 104
  %v524 = vpop.permute.xlu0 %523
  %v527 = vadd.f32 %v507, %v522
  %v528 = vadd.f32 %v508, %v524
  %s529 = sld [smem:[#allocation3 + $0x5]]
  %s530 = scvt.s32.f32 %s529
  %v531 = vstv %s530
  %v532 = vmul.f32 %v531, %v440
  %v533 = vmul.f32 %v531, %v441
  %536 = vrot.lane.b32.xlu0 %v532, 124
  %v537 = vpop.permute.xlu0 %536
  %538 = vrot.lane.b32.xlu0 %v533, 124
  %v539 = vpop.permute.xlu0 %538
  %v542 = vadd.f32 %v59, %v537
  %v543 = vadd.f32 %v62, %v539
  %545 = vset.pattern.permute.xlu0 0
  %546 = vperm.xlu0 %545, %v527
  %v547 = vpop.permute.xlu0 %546
  %550 = vset.pattern.permute.xlu0 0
  %551 = vperm.xlu0 %550, %v528
  %v552 = vpop.permute.xlu0 %551
  %v554 = vmul.f32 %v547, %v542
  %v555 = vmul.f32 %v552, %v543
  %v556 = vadd.f32 %v554, 0.0
  %v557 = vadd.f32 %v555, 0.0
  %558 = vset.pattern.permute.xlu0 1
  %559 = vperm.xlu0 %558, %v527
  %v560 = vpop.permute.xlu0 %559
  %562 = vset.pattern.permute.xlu0 1
  %563 = vperm.xlu0 %562, %v528
  %v564 = vpop.permute.xlu0 %563
  %v566 = vmul.f32 %v560, %v542
  %v567 = vmul.f32 %v564, %v543
  %570 = vrot.lane.b32.xlu0 %v566, 120
  %v571 = vpop.permute.xlu0 %570
  %572 = vrot.lane.b32.xlu0 %v567, 120
  %v573 = vpop.permute.xlu0 %572
  %v576 = vadd.f32 %v556, %v571
  %v577 = vadd.f32 %v557, %v573
  %578 = vset.pattern.permute.xlu0 2
  %579 = vperm.xlu0 %578, %v527
  %v580 = vpop.permute.xlu0 %579
  %582 = vset.pattern.permute.xlu0 2
  %583 = vperm.xlu0 %582, %v528
  %v584 = vpop.permute.xlu0 %583
  %v586 = vmul.f32 %v580, %v542
  %v587 = vmul.f32 %v584, %v543
  %590 = vrot.lane.b32.xlu0 %v586, 112
  %v591 = vpop.permute.xlu0 %590
  %592 = vrot.lane.b32.xlu0 %v587, 112
  %v593 = vpop.permute.xlu0 %592
  %v596 = vadd.f32 %v576, %v591
  %v597 = vadd.f32 %v577, %v593
  %598 = vset.pattern.permute.xlu0 3
  %599 = vperm.xlu0 %598, %v527
  %v600 = vpop.permute.xlu0 %599
  %602 = vset.pattern.permute.xlu0 3
  %603 = vperm.xlu0 %602, %v528
  %v604 = vpop.permute.xlu0 %603
  %v606 = vmul.f32 %v600, %v542
  %v607 = vmul.f32 %v604, %v543
  %610 = vrot.lane.b32.xlu0 %v606, 104
  %v611 = vpop.permute.xlu0 %610
  %612 = vrot.lane.b32.xlu0 %v607, 104
  %v613 = vpop.permute.xlu0 %612
  %v616 = vadd.f32 %v596, %v611
  %v617 = vadd.f32 %v597, %v613
  %s618 = sld [smem:[#allocation3 + $0x6]]
  %s619 = scvt.s32.f32 %s618
  %v620 = vstv %s619
  %v621 = vmul.f32 %v620, %v440
  %v622 = vmul.f32 %v620, %v441
  %625 = vrot.lane.b32.xlu0 %v621, 124
  %v626 = vpop.permute.xlu0 %625
  %627 = vrot.lane.b32.xlu0 %v622, 124
  %v628 = vpop.permute.xlu0 %627
  %v631 = vadd.f32 %v59, %v626
  %v632 = vadd.f32 %v62, %v628
  %634 = vset.pattern.permute.xlu0 32
  %635 = vperm.xlu0 %634, %v616
  %v636 = vpop.permute.xlu0 %635
  %639 = vset.pattern.permute.xlu0 32
  %640 = vperm.xlu0 %639, %v617
  %v641 = vpop.permute.xlu0 %640
  %v643 = vmul.f32 %v636, %v631
  %v644 = vmul.f32 %v641, %v632
  %v645 = vadd.f32 %v643, 0.0
  %v646 = vadd.f32 %v644, 0.0
  %647 = vset.pattern.permute.xlu0 33
  %648 = vperm.xlu0 %647, %v616
  %v649 = vpop.permute.xlu0 %648
  %651 = vset.pattern.permute.xlu0 33
  %652 = vperm.xlu0 %651, %v617
  %v653 = vpop.permute.xlu0 %652
  %v655 = vmul.f32 %v649, %v631
  %v656 = vmul.f32 %v653, %v632
  %659 = vrot.lane.b32.xlu0 %v655, 120
  %v660 = vpop.permute.xlu0 %659
  %661 = vrot.lane.b32.xlu0 %v656, 120
  %v662 = vpop.permute.xlu0 %661
  %v665 = vadd.f32 %v645, %v660
  %v666 = vadd.f32 %v646, %v662
  %667 = vset.pattern.permute.xlu0 34
  %668 = vperm.xlu0 %667, %v616
  %v669 = vpop.permute.xlu0 %668
  %671 = vset.pattern.permute.xlu0 34
  %672 = vperm.xlu0 %671, %v617
  %v673 = vpop.permute.xlu0 %672
  %v675 = vmul.f32 %v669, %v631
  %v676 = vmul.f32 %v673, %v632
  %679 = vrot.lane.b32.xlu0 %v675, 112
  %v680 = vpop.permute.xlu0 %679
  %681 = vrot.lane.b32.xlu0 %v676, 112
  %v682 = vpop.permute.xlu0 %681
  %v685 = vadd.f32 %v665, %v680
  %v686 = vadd.f32 %v666, %v682
  %687 = vset.pattern.permute.xlu0 35
  %688 = vperm.xlu0 %687, %v616
  %v689 = vpop.permute.xlu0 %688
  %691 = vset.pattern.permute.xlu0 35
  %692 = vperm.xlu0 %691, %v617
  %v693 = vpop.permute.xlu0 %692
  %v695 = vmul.f32 %v689, %v631
  %v696 = vmul.f32 %v693, %v632
  %699 = vrot.lane.b32.xlu0 %v695, 104
  %v700 = vpop.permute.xlu0 %699
  %701 = vrot.lane.b32.xlu0 %v696, 104
  %v702 = vpop.permute.xlu0 %701
  %v705 = vadd.f32 %v685, %v700
  %v706 = vadd.f32 %v686, %v702
  %s707 = sld [smem:[#allocation3 + $0x7]]
  %s708 = scvt.s32.f32 %s707
  %v709 = vstv %s708
  %v710 = vmul.f32 %v709, %v440
  %v711 = vmul.f32 %v709, %v441
  %714 = vrot.lane.b32.xlu0 %v710, 124
  %v715 = vpop.permute.xlu0 %714
  %716 = vrot.lane.b32.xlu0 %v711, 124
  %v717 = vpop.permute.xlu0 %716
  %v720 = vadd.f32 %v59, %v715
  %v721 = vadd.f32 %v62, %v717
  %723 = vset.pattern.permute.xlu0 64
  %724 = vperm.xlu0 %723, %v705
  %v725 = vpop.permute.xlu0 %724
  %728 = vset.pattern.permute.xlu0 64
  %729 = vperm.xlu0 %728, %v706
  %v730 = vpop.permute.xlu0 %729
  %v732 = vmul.f32 %v725, %v720
  %v733 = vmul.f32 %v730, %v721
  %v734 = vadd.f32 %v732, 0.0
  %v735 = vadd.f32 %v733, 0.0
  %736 = vset.pattern.permute.xlu0 65
  %737 = vperm.xlu0 %736, %v705
  %v738 = vpop.permute.xlu0 %737
  %740 = vset.pattern.permute.xlu0 65
  %741 = vperm.xlu0 %740, %v706
  %v742 = vpop.permute.xlu0 %741
  %v744 = vmul.f32 %v738, %v720
  %v745 = vmul.f32 %v742, %v721
  %748 = vrot.lane.b32.xlu0 %v744, 120
  %v749 = vpop.permute.xlu0 %748
  %750 = vrot.lane.b32.xlu0 %v745, 120
  %v751 = vpop.permute.xlu0 %750
  %v754 = vadd.f32 %v734, %v749
  %v755 = vadd.f32 %v735, %v751
  %756 = vset.pattern.permute.xlu0 66
  %757 = vperm.xlu0 %756, %v705
  %v758 = vpop.permute.xlu0 %757
  %760 = vset.pattern.permute.xlu0 66
  %761 = vperm.xlu0 %760, %v706
  %v762 = vpop.permute.xlu0 %761
  %v764 = vmul.f32 %v758, %v720
  %v765 = vmul.f32 %v762, %v721
  %768 = vrot.lane.b32.xlu0 %v764, 112
  %v769 = vpop.permute.xlu0 %768
  %770 = vrot.lane.b32.xlu0 %v765, 112
  %v771 = vpop.permute.xlu0 %770
  %v774 = vadd.f32 %v754, %v769
  %v775 = vadd.f32 %v755, %v771
  %776 = vset.pattern.permute.xlu0 67
  %777 = vperm.xlu0 %776, %v705
  %v778 = vpop.permute.xlu0 %777
  %780 = vset.pattern.permute.xlu0 67
  %781 = vperm.xlu0 %780, %v706
  %v782 = vpop.permute.xlu0 %781
  %v784 = vmul.f32 %v778, %v720
  %v785 = vmul.f32 %v782, %v721
  %788 = vrot.lane.b32.xlu0 %v784, 104
  %v789 = vpop.permute.xlu0 %788
  %790 = vrot.lane.b32.xlu0 %v785, 104
  %v791 = vpop.permute.xlu0 %790
  %v794 = vadd.f32 %v774, %v789
  %v795 = vadd.f32 %v775, %v791
  %v796 = vld [vmem:[%s2] sm:$0xf]
  %v797 = vld [vmem:[%s2 + $0x4] sm:$0xf]
  %v798 = vmul.f32 %v797, 0.5
  %v799 = vmul.f32 %v798, 1.442695
  %v800 = vpow.pop %v799
  %v801 = vld [vmem:[%s4] sm:$0xff]
  %v802 = vld [vmem:[%s4 + $0x20] sm:$0xff]
  %v803 = vperm.slane %v800, 0
  %v804 = vmul.f32 %v801, %v803
  %v805 = vmul.f32 %v802, %v803
  %v806 = vperm.slane %v796, 0
  %v807 = vadd.f32 %v806, %v804
  %v808 = vadd.f32 %v806, %v805
  %810 = vset.pattern.permute.xlu0 96
  %811 = vperm.xlu0 %810, %v794
  %v812 = vpop.permute.xlu0 %811
  %815 = vset.pattern.permute.xlu0 96
  %816 = vperm.xlu0 %815, %v795
  %v817 = vpop.permute.xlu0 %816
  %v819 = vmul.f32 %v812, %v807
  %v820 = vmul.f32 %v817, %v808
  %v821 = vadd.f32 %v819, 0.0
  %v822 = vadd.f32 %v820, 0.0
  %v823 = vld [vmem:[%s4 + $0x8] sm:$0xff]
  %v824 = vld [vmem:[%s4 + $0x28] sm:$0xff]
  %v825 = vperm.slane %v800, 1
  %v826 = vmul.f32 %v823, %v825
  %v827 = vmul.f32 %v824, %v825
  %v828 = vperm.slane %v796, 1
  %v829 = vadd.f32 %v828, %v826
  %v830 = vadd.f32 %v828, %v827
  %831 = vset.pattern.permute.xlu0 97
  %832 = vperm.xlu0 %831, %v794
  %v833 = vpop.permute.xlu0 %832
  %835 = vset.pattern.permute.xlu0 97
  %836 = vperm.xlu0 %835, %v795
  %v837 = vpop.permute.xlu0 %836
  %v839 = vmul.f32 %v833, %v829
  %v840 = vmul.f32 %v837, %v830
  %v841 = vadd.f32 %v821, %v839
  %v842 = vadd.f32 %v822, %v840
  %v843 = vld [vmem:[%s4 + $0x10] sm:$0xff]
  %v844 = vld [vmem:[%s4 + $0x30] sm:$0xff]
  %v845 = vperm.slane %v800, 2
  %v846 = vmul.f32 %v843, %v845
  %v847 = vmul.f32 %v844, %v845
  %v848 = vperm.slane %v796, 2
  %v849 = vadd.f32 %v848, %v846
  %v850 = vadd.f32 %v848, %v847
  %851 = vset.pattern.permute.xlu0 98
  %852 = vperm.xlu0 %851, %v794
  %v853 = vpop.permute.xlu0 %852
  %855 = vset.pattern.permute.xlu0 98
  %856 = vperm.xlu0 %855, %v795
  %v857 = vpop.permute.xlu0 %856
  %v859 = vmul.f32 %v853, %v849
  %v860 = vmul.f32 %v857, %v850
  %v861 = vadd.f32 %v841, %v859
  %v862 = vadd.f32 %v842, %v860
  %v863 = vld [vmem:[%s4 + $0x18] sm:$0xff]
  %v864 = vld [vmem:[%s4 + $0x38] sm:$0xff]
  %v865 = vperm.slane %v800, 3
  %v866 = vmul.f32 %v863, %v865
  %v867 = vmul.f32 %v864, %v865
  %v868 = vperm.slane %v796, 3
  %v869 = vadd.f32 %v868, %v866
  %v870 = vadd.f32 %v868, %v867
  %871 = vset.pattern.permute.xlu0 99
  %872 = vperm.xlu0 %871, %v794
  %v873 = vpop.permute.xlu0 %872
  %875 = vset.pattern.permute.xlu0 99
  %876 = vperm.xlu0 %875, %v795
  %v877 = vpop.permute.xlu0 %876
  %v879 = vmul.f32 %v873, %v869
  %v880 = vmul.f32 %v877, %v870
  %v881 = vadd.f32 %v861, %v879
  %v882 = vadd.f32 %v862, %v880
  %883 = vst [vmem:[%s5] sm:$0xff] %v881
  %884 = vst [vmem:[%s5 + $0x8] sm:$0xff] %v882
  // Predicated region
  $region18: #{bayesian_tn_forward.1} parent=0 // pred_check
    _
  $region19: #{bayesian_tn_forward.1} parent=0 // pred_check_branch
    %886 = sbr.rel (0) target = $region21
  $region20: #{bayesian_tn_forward.1} parent=0 // pred_region
    _
  $region21: #{bayesian_tn_forward.1} parent=0 // pred_fallthru
    _
  // Predicated region
  $region22: #{bayesian_tn_forward.1} parent=0 // pred_check
    _
  $region23: #{bayesian_tn_forward.1} parent=0 // pred_check_branch
    %888 = sbr.rel (0) target = $region25
  $region24: #{bayesian_tn_forward.1} parent=0 // pred_region
    _
  $region25: #{bayesian_tn_forward.1} parent=0 // pred_fallthru
    _

</llo_original>
